<compile_context>
chip_gen: v7x
topology: tpu7x:2x2x1
jax: 0.10.0
libtpu: 0.0.40
codegen_flags: <defaults>
</compile_context>

<pallas_src>
import math

import jax
import jax.numpy as jnp
from jax.experimental import pallas as pl
from jax.experimental.pallas import tpu as pltpu

LANE = 128


def _round_up(v, m):
    return ((v + m - 1) // m) * m


def _default_compute_dtype():
    """bf16 operands (f32 accumulation) on v6e/v7x, f32 on v5e/older/unknown."""
    try:
        kind = jax.devices()[0].device_kind.lower()
    except Exception:
        return jnp.float32
    if ("v6" in kind) or ("v7" in kind) or ("7x" in kind):
        return jnp.bfloat16
    return jnp.float32


def _pad2(m, rows, cols):
    return jnp.pad(m, ((0, rows - m.shape[0]), (0, cols - m.shape[1])))


def _link_pred_kernel(x_ref, a_ref, s_ref, w1_ref, b1_ref, w2_ref, b2_ref,
                      out_ref):
    """Fused SAGE(2 layers, mean agg) + u.v edge-score kernel."""
    cdt = x_ref.dtype
    x = x_ref[...]                       # [Np, Dp]   compute dtype
    a = a_ref[...]                       # [Np, Np]   compute dtype

    # ---- SAGE layer 1:  relu([X | A@X] @ [[W_self1],[W_neigh1]] + b1) ------
    ax = jnp.dot(a, x, preferred_element_type=jnp.float32).astype(cdt)
    z1 = jnp.concatenate([x, ax], axis=-1)                      # [Np, 2*Dp]
    h1 = jnp.dot(z1, w1_ref[...],
                 preferred_element_type=jnp.float32) + b1_ref[...]
    h1 = jnp.maximum(h1, 0.0).astype(cdt)                       # [Np, Hp]

    # ---- SAGE layer 2:  [H1 | A@H1] @ [[W_self2],[W_neigh2]] + b2 ----------
    ah = jnp.dot(a, h1, preferred_element_type=jnp.float32).astype(cdt)
    z2 = jnp.concatenate([h1, ah], axis=-1)                     # [Np, 2*Hp]
    h2 = (jnp.dot(z2, w2_ref[...],
                  preferred_element_type=jnp.float32) + b2_ref[...]).astype(cdt)

    # ---- edge scores: ONE stacked one-hot gather on the MXU, lane reduce ---
    hsd = jnp.dot(s_ref[...], h2, preferred_element_type=jnp.float32)
    ep = s_ref.shape[0] // 2             # static; ep is a multiple of 8
    hs = hsd[:ep, :]                     # tile-aligned static slices
    hd = hsd[ep:, :]
    score = jnp.sum(hs * hd, axis=-1, keepdims=True)            # [Ep, 1]
    out_ref[...] = score.astype(out_ref.dtype)


def link_pred_forward(x, a_mean, s_src, s_dst, ws1, wn1, b1, ws2, wn2, b2,
                      *, compute_dtype=None):
    """x:[N,Din], a_mean:[N,N], s_src/s_dst:[Ep,N] one-hot, ws*/wn*: self /
    neighbor weights, b*: [1,H] biases  ->  edge scores [Ep, 1] (f32)."""
    if compute_dtype is None:
        compute_dtype = _default_compute_dtype()
    cdt = compute_dtype
    f32 = jnp.float32

    n, din = x.shape
    hid = ws1.shape[1]
    out_f = ws2.shape[1]
    ep = s_src.shape[0]
    assert ep % 8 == 0, "pad the edge count to a multiple of 8"

    # Zero-pad feature axes to the 128-lane width and the node axis to the
    # sublane width: lane-dense operands, aligned in-kernel concats/slices.
    # Padding is exact (padded rows/cols are zero).
    din_p, hid_p, out_p = (_round_up(d, LANE) for d in (din, hid, out_f))
    n_p = _round_up(n, 16 if cdt == jnp.bfloat16 else 8)

    x_p = _pad2(x, n_p, din_p).astype(cdt)
    a_p = _pad2(a_mean, n_p, n_p).astype(cdt)
    # Stack src/dst one-hot rows so the edge gather is ONE MXU matmul.
    s_p = jnp.concatenate([_pad2(s_src, ep, n_p),
                           _pad2(s_dst, ep, n_p)], axis=0).astype(cdt)

    # Stack self/neighbor weights so each layer is ONE wide MXU matmul.
    w1_p = jnp.concatenate([_pad2(ws1, din_p, hid_p),
                            _pad2(wn1, din_p, hid_p)], axis=0).astype(cdt)
    w2_p = jnp.concatenate([_pad2(ws2, hid_p, out_p),
                            _pad2(wn2, hid_p, out_p)], axis=0).astype(cdt)
    b1_p = _pad2(b1.reshape(1, -1), 1, hid_p).astype(f32)
    b2_p = _pad2(b2.reshape(1, -1), 1, out_p).astype(f32)

    flops = 2 * (n_p * n_p * din_p                 # A @ X
                 + n_p * (2 * din_p) * hid_p       # [X|AX] @ W1
                 + n_p * n_p * hid_p               # A @ H1
                 + n_p * (2 * hid_p) * out_p       # [H1|AH1] @ W2
                 + (2 * ep) * n_p * out_p)         # stacked one-hot gather
    flops += 2 * ep * out_p                        # u . v reduce
    operands = (x_p, a_p, s_p, w1_p, b1_p, w2_p, b2_p)
    bytes_accessed = sum(math.prod(o.shape) * o.dtype.itemsize for o in operands)
    bytes_accessed += ep * 1 * 4                   # output

    vmem = pl.BlockSpec(memory_space=pltpu.MemorySpace.VMEM)
    # TODO(synk): for large N or batched graphs, switch to a gridded
    # PrefetchScalarGridSpec (dst-row tiles, "parallel" semantics, VMEM-aware
    # A tiling) so v7x's 64 MiB VMEM and second TensorCore are used.
    return pl.pallas_call(
        _link_pred_kernel,
        out_shape=jax.ShapeDtypeStruct((ep, 1), f32),
        in_specs=[vmem] * 7,
        out_specs=vmem,
        cost_estimate=pl.CostEstimate(flops=flops, transcendentals=0,
                                      bytes_accessed=bytes_accessed),
    )(*operands)


# ----------------------------- graph glue (plain JAX) -----------------------
def build_mean_adjacency(src, dst, num_nodes):
    """Dense row-normalized adjacency: (A_mean @ X)[i] = mean_{j->i} X[j]."""
    a = jnp.zeros((num_nodes, num_nodes), jnp.float32)
    a = a.at[dst, src].add(1.0)
    deg_in = a.sum(axis=1)
    inv = jnp.where(deg_in > 0, 1.0 / jnp.maximum(deg_in, 1.0), 0.0)
    return a * inv[:, None]


def build_onehot(idx, num_nodes, num_rows):
    """[num_rows, num_nodes] one-hot rows; rows beyond len(idx) are all-zero."""
    idx_p = jnp.pad(idx, (0, num_rows - idx.shape[0]), constant_values=-1)
    return (idx_p[:, None] == jnp.arange(num_nodes)[None, :]).astype(jnp.float32)


if __name__ == "__main__":
    N = 32          # nodes
    IN_DIM = 16
    HIDDEN = 32
    OUT_DIM = 16

    key = jax.random.PRNGKey(0)
    k_x, k_ws1, k_wn1, k_ws2, k_wn2, k_b1, k_b2 = jax.random.split(key, 7)

    x = jax.random.normal(k_x, (N, IN_DIM), jnp.float32)

    # Deterministic synthetic edge list (single homogeneous graph).
    ids = jnp.arange(N)
    src = jnp.concatenate([ids, ids])
    dst = jnp.concatenate([(ids + 1) % N, (3 * ids + 5) % N])
    E = int(src.shape[0])                       # 64
    E_pad = _round_up(E, 8)

    a_mean = build_mean_adjacency(src, dst, N)
    s_src = build_onehot(src, N, E_pad)
    s_dst = build_onehot(dst, N, E_pad)

    def glorot(k, shape):
        return jax.random.normal(k, shape, jnp.float32) / jnp.sqrt(shape[0])

    ws1 = glorot(k_ws1, (IN_DIM, HIDDEN))
    wn1 = glorot(k_wn1, (IN_DIM, HIDDEN))
    ws2 = glorot(k_ws2, (HIDDEN, OUT_DIM))
    wn2 = glorot(k_wn2, (HIDDEN, OUT_DIM))
    b1 = jax.random.normal(k_b1, (1, HIDDEN), jnp.float32) * 0.01
    b2 = jax.random.normal(k_b2, (1, OUT_DIM), jnp.float32) * 0.01

    cdt = _default_compute_dtype()
    scores_pad = link_pred_forward(x, a_mean, s_src, s_dst,
                                   ws1, wn1, b1, ws2, wn2, b2,
                                   compute_dtype=cdt)
    jax.block_until_ready(scores_pad)
    scores = scores_pad[:E]

    # Pure-JAX reference with matching operand dtypes / cast points.
    def ref():
        xc, ac = x.astype(cdt), a_mean.astype(cdt)
        ax = jnp.dot(ac, xc, preferred_element_type=jnp.float32).astype(cdt)
        h1 = (jnp.dot(xc, ws1.astype(cdt), preferred_element_type=jnp.float32)
              + jnp.dot(ax, wn1.astype(cdt), preferred_element_type=jnp.float32)
              + b1)
        h1 = jnp.maximum(h1, 0.0).astype(cdt)
        ah = jnp.dot(ac, h1, preferred_element_type=jnp.float32).astype(cdt)
        h2 = (jnp.dot(h1, ws2.astype(cdt), preferred_element_type=jnp.float32)
              + jnp.dot(ah, wn2.astype(cdt), preferred_element_type=jnp.float32)
              + b2)
        h2 = h2.astype(cdt).astype(jnp.float32)
        return jnp.sum(h2[src] * h2[dst], axis=-1, keepdims=True)

    tol = 5e-2 if cdt == jnp.bfloat16 else 5e-3
    assert scores.shape == (E, 1)
    assert jnp.allclose(scores, ref(), atol=tol, rtol=tol)
    print("KERNEL_OK")
</pallas_src>

<mosaic_0001>
module attributes {stable_mosaic.version = 11 : i64} {
  func.func @_link_pred_kernel(%arg0: memref<32x128xf32, #tpu.memory_space<vmem>>, %arg1: memref<32x32xf32, #tpu.memory_space<vmem>>, %arg2: memref<128x32xf32, #tpu.memory_space<vmem>>, %arg3: memref<256x128xf32, #tpu.memory_space<vmem>>, %arg4: memref<1x128xf32, #tpu.memory_space<vmem>>, %arg5: memref<256x128xf32, #tpu.memory_space<vmem>>, %arg6: memref<1x128xf32, #tpu.memory_space<vmem>>, %arg7: memref<64x1xf32, #tpu.memory_space<vmem>>) attributes {dimension_semantics = [], scalar_prefetch = 0 : i64, scratch_operands = 0 : i64, tpu.core_type = #tpu.core_type<tc>} {
    %c0 = arith.constant 0 : index
    %c0_0 = arith.constant 0 : index
    %0 = vector.load %arg0[%c0, %c0_0] : memref<32x128xf32, #tpu.memory_space<vmem>>, vector<32x128xf32>
    %c0_1 = arith.constant 0 : index
    %c0_2 = arith.constant 0 : index
    %1 = vector.load %arg1[%c0_1, %c0_2] : memref<32x32xf32, #tpu.memory_space<vmem>>, vector<32x32xf32>
    %cst = arith.constant dense<0.000000e+00> : vector<32x128xf32>
    %2 = tpu.matmul %1, %0, %cst {dimension_numbers = #tpu.dot_dimension_numbers<[1], [0], [0], [1], [0, 0, 1, 1], [], []>} : vector<32x32xf32>, vector<32x128xf32>, vector<32x128xf32> -> vector<32x128xf32>
    %3 = tpu.concatenate %0, %2 in 1 : vector<32x128xf32>, vector<32x128xf32> -> vector<32x256xf32>
    %c0_3 = arith.constant 0 : index
    %c0_4 = arith.constant 0 : index
    %4 = vector.load %arg3[%c0_3, %c0_4] : memref<256x128xf32, #tpu.memory_space<vmem>>, vector<256x128xf32>
    %cst_5 = arith.constant dense<0.000000e+00> : vector<32x128xf32>
    %5 = tpu.matmul %3, %4, %cst_5 {dimension_numbers = #tpu.dot_dimension_numbers<[1], [0], [0], [1], [0, 0, 1, 1], [], []>} : vector<32x256xf32>, vector<256x128xf32>, vector<32x128xf32> -> vector<32x128xf32>
    %c0_6 = arith.constant 0 : index
    %c0_7 = arith.constant 0 : index
    %6 = vector.load %arg4[%c0_6, %c0_7] : memref<1x128xf32, #tpu.memory_space<vmem>>, vector<1x128xf32>
    %7 = vector.broadcast %6 : vector<1x128xf32> to vector<32x128xf32>
    %8 = arith.addf %5, %7 : vector<32x128xf32>
    %cst_8 = arith.constant 0.000000e+00 : f32
    %9 = vector.broadcast %cst_8 : f32 to vector<32x128xf32>
    %10 = arith.maximumf %8, %9 : vector<32x128xf32>
    %cst_9 = arith.constant dense<0.000000e+00> : vector<32x128xf32>
    %11 = tpu.matmul %1, %10, %cst_9 {dimension_numbers = #tpu.dot_dimension_numbers<[1], [0], [0], [1], [0, 0, 1, 1], [], []>} : vector<32x32xf32>, vector<32x128xf32>, vector<32x128xf32> -> vector<32x128xf32>
    %12 = tpu.concatenate %10, %11 in 1 : vector<32x128xf32>, vector<32x128xf32> -> vector<32x256xf32>
    %c0_10 = arith.constant 0 : index
    %c0_11 = arith.constant 0 : index
    %13 = vector.load %arg5[%c0_10, %c0_11] : memref<256x128xf32, #tpu.memory_space<vmem>>, vector<256x128xf32>
    %cst_12 = arith.constant dense<0.000000e+00> : vector<32x128xf32>
    %14 = tpu.matmul %12, %13, %cst_12 {dimension_numbers = #tpu.dot_dimension_numbers<[1], [0], [0], [1], [0, 0, 1, 1], [], []>} : vector<32x256xf32>, vector<256x128xf32>, vector<32x128xf32> -> vector<32x128xf32>
    %c0_13 = arith.constant 0 : index
    %c0_14 = arith.constant 0 : index
    %15 = vector.load %arg6[%c0_13, %c0_14] : memref<1x128xf32, #tpu.memory_space<vmem>>, vector<1x128xf32>
    %16 = vector.broadcast %15 : vector<1x128xf32> to vector<32x128xf32>
    %17 = arith.addf %14, %16 : vector<32x128xf32>
    %c0_15 = arith.constant 0 : index
    %c0_16 = arith.constant 0 : index
    %18 = vector.load %arg2[%c0_15, %c0_16] : memref<128x32xf32, #tpu.memory_space<vmem>>, vector<128x32xf32>
    %cst_17 = arith.constant dense<0.000000e+00> : vector<128x128xf32>
    %19 = tpu.matmul %18, %17, %cst_17 {dimension_numbers = #tpu.dot_dimension_numbers<[1], [0], [0], [1], [0, 0, 1, 1], [], []>} : vector<128x32xf32>, vector<32x128xf32>, vector<128x128xf32> -> vector<128x128xf32>
    %20 = vector.extract_strided_slice %19 {offsets = [0, 0], sizes = [64, 128], strides = [1, 1]} : vector<128x128xf32> to vector<64x128xf32>
    %21 = vector.extract_strided_slice %19 {offsets = [64, 0], sizes = [64, 128], strides = [1, 1]} : vector<128x128xf32> to vector<64x128xf32>
    %22 = arith.mulf %20, %21 : vector<64x128xf32>
    %cst_18 = arith.constant dense<0.000000e+00> : vector<64xf32>
    %23 = vector.multi_reduction <add>, %22, %cst_18 [1] : vector<64x128xf32> to vector<64xf32>
    %24 = vector.shape_cast %23 : vector<64xf32> to vector<64x1xf32>
    %c0_19 = arith.constant 0 : index
    %c0_20 = arith.constant 0 : index
    %25 = vector.load %arg7[%c0_19, %c0_20] : memref<64x1xf32, #tpu.memory_space<vmem>>, vector<64x1xf32>
    tpu.vector_store %arg7[%c0_19, %c0_20], %24 {strides = array<i32>} : memref<64x1xf32, #tpu.memory_space<vmem>>, vector<64x1xf32>,
    return
  }
}

</mosaic_0001>

<llo_original>
// kernel: tpu_custom_call.1
$region0: #{tpu_custom_call.1}
  #allocation0 [shape = 'u32[]', space=smem, size = 0x4, offset = 0x4, fixed_abs, tag = 'smem constant byte address 0x4 - core index']
  #allocation1 [shape = 'u32[144,128]{1,0:T(1,128)}', space=vmem, size = 0x12000, scoped, tag = 'internal scratch']
  %s0 = inlined_call_operand.vmem [shape: f32[32,128], index: 0, kind: input, shape index: {}]
  %s1 = inlined_call_operand.vmem [shape: f32[32,32], index: 1, kind: input, shape index: {}]
  %s2 = inlined_call_operand.vmem [shape: f32[128,32], index: 2, kind: input, shape index: {}]
  %s3 = inlined_call_operand.hbm [shape: f32[256,128], index: 3, kind: input, shape index: {}]
  %s4 = inlined_call_operand.vmem [shape: f32[1,128], index: 4, kind: input, shape index: {}]
  %s5 = inlined_call_operand.hbm [shape: f32[256,128], index: 5, kind: input, shape index: {}]
  %s6 = inlined_call_operand.vmem [shape: f32[1,128], index: 6, kind: input, shape index: {}]
  %s7 = inlined_call_operand.vmem [shape: f32[64,1], index: 7, kind: output, shape index: {}]
  %s8 = sld [smem:[#allocation0]]
  $region46: #{tpu_custom_call.1} parent=0
    _
  %s10 = ssub.s32 1, %s8
  %s11 = scalar_select 0, %s10, %s8
  $region1: #{tpu_custom_call.1} parent=0
    #allocation2 [shape = 'u8[131072]{0}', space=vmem, size = 0x20000, scoped, tag = 'input window, operand 3, single buffered']
    #allocation3 [shape = 's32[1]{0}', space=sflag, size = 0x4, scoped, tag = 'scoped memory for tpu_custom_call.1']
    #allocation4 [shape = 'u8[131072]{0}', space=vmem, size = 0x20000, scoped, tag = 'input window, operand 5, single buffered']
    #allocation5 [shape = 's32[1]{0}', space=sflag, size = 0x4, scoped, tag = 'scoped memory for tpu_custom_call.1']
    %12 = vsyncpa [#allocation3], 0
    %13 = vsyncpa [#allocation5], 0
    // Predicated region
    $region2: #{tpu_custom_call.1} parent=1 // pred_check
      _
    $region3: #{tpu_custom_call.1} parent=1 // pred_check_branch
      %15 = sbr.rel (0) target = $region5
    $region4: #{tpu_custom_call.1} parent=1 // pred_region
      _
    $region5: #{tpu_custom_call.1} parent=1 // pred_fallthru
      _
    // Predicated region
    $region6: #{tpu_custom_call.1} parent=1 // pred_check
      _
    $region7: #{tpu_custom_call.1} parent=1 // pred_check_branch
      %17 = sbr.rel (0) target = $region9
    $region8: #{tpu_custom_call.1} parent=1 // pred_region
      _
    $region9: #{tpu_custom_call.1} parent=1 // pred_fallthru
      _
    // Predicated region
    $region10: #{tpu_custom_call.1} parent=1 // pred_check
      _
    $region11: #{tpu_custom_call.1} parent=1 // pred_check_branch
      %19 = sbr.rel (0) target = $region13
    $region12: #{tpu_custom_call.1} parent=1 // pred_region
      _
    $region13: #{tpu_custom_call.1} parent=1 // pred_fallthru
      _
    // Predicated region
    $region14: #{tpu_custom_call.1} parent=1 // pred_check
      _
    $region15: #{tpu_custom_call.1} parent=1 // pred_check_branch
      %21 = sbr.rel (0) target = $region17
    $region16: #{tpu_custom_call.1} parent=1 // pred_region
      %s23 = ssub.s32 4096, 4096
      %24 = vsyncadd [#allocation3], %s23
      %s25 = sshll.u32 [#allocation2], 4
      %s26 = int_to_ptr.vmem [resolvable:$true] %s25
      %31 = dma.hbm_to_vmem [thread:$0]  %s3, 4096, %s26, [#allocation3], 128, 128, 8
    $region17: #{tpu_custom_call.1} parent=1 // pred_fallthru
      _
    // Predicated region
    $region18: #{tpu_custom_call.1} parent=1 // pred_check
      _
    $region19: #{tpu_custom_call.1} parent=1 // pred_check_branch
      %33 = sbr.rel (0) target = $region21
    $region20: #{tpu_custom_call.1} parent=1 // pred_region
      _
    $region21: #{tpu_custom_call.1} parent=1 // pred_fallthru
      _
    // Predicated region
    $region22: #{tpu_custom_call.1} parent=1 // pred_check
      _
    $region23: #{tpu_custom_call.1} parent=1 // pred_check_branch
      %35 = sbr.rel (0) target = $region25
    $region24: #{tpu_custom_call.1} parent=1 // pred_region
      %s37 = ssub.s32 4096, 4096
      %38 = vsyncadd [#allocation5], %s37
      %s39 = sshll.u32 [#allocation4], 4
      %s40 = int_to_ptr.vmem [resolvable:$true] %s39
      %45 = dma.hbm_to_vmem [thread:$0]  %s5, 4096, %s40, [#allocation5], 128, 128, 8
    $region25: #{tpu_custom_call.1} parent=1 // pred_fallthru
      _
    // Predicated region
    $region26: #{tpu_custom_call.1} parent=1 // pred_check
      _
    $region27: #{tpu_custom_call.1} parent=1 // pred_check_branch
      %47 = sbr.rel (0) target = $region29
    $region28: #{tpu_custom_call.1} parent=1 // pred_region
      _
    $region29: #{tpu_custom_call.1} parent=1 // pred_fallthru
      _
    // Predicated region
    $region30: #{tpu_custom_call.1} parent=1 // pred_check
      _
    $region31: #{tpu_custom_call.1} parent=1 // pred_check_branch
      %49 = sbr.rel (0) target = $region33
    $region32: #{tpu_custom_call.1} parent=1 // pred_region
      %50 = dma.done [#allocation3], 4096
    $region33: #{tpu_custom_call.1} parent=1 // pred_fallthru
      _
    // Predicated region
    $region34: #{tpu_custom_call.1} parent=1 // pred_check
      _
    $region35: #{tpu_custom_call.1} parent=1 // pred_check_branch
      %52 = sbr.rel (0) target = $region37
    $region36: #{tpu_custom_call.1} parent=1 // pred_region
      %53 = dma.done [#allocation5], 4096
    $region37: #{tpu_custom_call.1} parent=1 // pred_fallthru
      _
    %v54 = vld [vmem:[%s0] sm:$0xff]
    %v55 = vld [vmem:[%s0 + $0x8] sm:$0xff]
    %v56 = vld [vmem:[%s0 + $0x10] sm:$0xff]
    %v57 = vld [vmem:[%s0 + $0x18] sm:$0xff]
    %v58 = vld [vmem:[%s1] sm:$0xff]
    %v59 = vld [vmem:[%s1 + $0x8] sm:$0xff]
    %v60 = vld [vmem:[%s1 + $0x10] sm:$0xff]
    %v61 = vld [vmem:[%s1 + $0x18] sm:$0xff]
    %vm62 = vcmask 261120
    %v64 = vsel %vm62, %v58, 0
    %v67 = vsel %vm62, %v59, 0
    %v70 = vsel %vm62, %v60, 0
    %v73 = vsel %vm62, %v61, 0
    %75 = vmatprep.subr.mxu0 0.0
    %76 = vmatpush1.msra.mxu0 %v54
    %77 = vmatprep.subr.mxu0 0.0
    %78 = vmatpush1.msra.mxu0 %v55
    %79 = vmatprep.subr.mxu0 0.0
    %80 = vmatpush1.msra.mxu0 %v56
    %81 = vmatprep.subr.mxu0 0.0
    %82 = vmatpush1.msra.mxu0 %v57
    %83 = vmatprep.subr.mxu0 0.0
    %84 = vmatpush1.msra.mxu0 0.0
    %85 = vmatprep.subr.mxu0 0.0
    %86 = vmatpush1.msra.mxu0 0.0
    %87 = vmatprep.subr.mxu0 0.0
    %88 = vmatpush1.msra.mxu0 0.0
    %89 = vmatprep.subr.mxu0 0.0
    %90 = vmatpush1.msra.mxu0 0.0
    %91 = vmatprep.subr.mxu0 0.0
    %92 = vmatpush1.msra.mxu0 0.0
    %93 = vmatprep.subr.mxu0 0.0
    %94 = vmatpush1.msra.mxu0 0.0
    %95 = vmatprep.subr.mxu0 0.0
    %96 = vmatpush1.msra.mxu0 0.0
    %97 = vmatprep.subr.mxu0 0.0
    %98 = vmatpush1.msra.mxu0 0.0
    %99 = vmatprep.subr.mxu0 0.0
    %100 = vmatpush1.msra.mxu0 0.0
    %101 = vmatprep.subr.mxu0 0.0
    %102 = vmatpush1.msra.mxu0 0.0
    %103 = vmatprep.subr.mxu0 0.0
    %104 = vmatpush1.msra.mxu0 0.0
    %105 = vmatprep.subr.mxu0 0.0
    %106 = vmatpush1.msra.mxu0 0.0
    %107 = vmatprep.subr.mxu0 0.0
    %108 = vmatpush1.msra.mxu0 0.0
    %109 = vmatprep.subr.mxu0 0.0
    %110 = vmatpush1.msra.mxu0 0.0
    %111 = vmatprep.subr.mxu0 0.0
    %112 = vmatpush1.msra.mxu0 0.0
    %113 = vmatprep.subr.mxu0 0.0
    %114 = vmatpush1.msra.mxu0 0.0
    %115 = vmatprep.subr.mxu0 0.0
    %116 = vmatpush1.msra.mxu0 0.0
    %117 = vmatprep.subr.mxu0 0.0
    %118 = vmatpush1.msra.mxu0 0.0
    %119 = vmatprep.subr.mxu0 0.0
    %120 = vmatpush1.msra.mxu0 0.0
    %121 = vmatprep.subr.mxu0 0.0
    %122 = vmatpush1.msra.mxu0 0.0
    %123 = vmatprep.subr.mxu0 0.0
    %124 = vmatpush1.msra.mxu0 0.0
    %125 = vmatprep.subr.mxu0 0.0
    %126 = vmatpush1.msra.mxu0 0.0
    %127 = vmatprep.subr.mxu0 0.0
    %128 = vmatpush1.msra.mxu0 0.0
    %129 = vmatprep.subr.mxu0 0.0
    %130 = vmatpush1.msra.mxu0 0.0
    %131 = vmatprep.subr.mxu0 0.0
    %132 = vmatpush1.msra.mxu0 0.0
    %133 = vmatprep.subr.mxu0 0.0
    %134 = vmatpush1.msra.mxu0 0.0
    %135 = vmatprep.subr.mxu0 0.0
    %136 = vmatpush1.msra.mxu0 0.0
    %137 = vmatprep.subr.mxu0 0.0
    %138 = vmatpush1.msra.mxu0 0.0
    %139 = vmatprep.mubr.f32.mxu0 0.0
    %140 = vmatmul.mubr.f32.gmra.mrb[0].mxu0 %v64
    %v141 = vpop.f32.mrb[0].mxu0
    %v142 = vadd.f32 0.0, %v141
    %v143 = vpop.f32.mrb[0].mxu0
    %144 = vmatprep.mubr.f32.mxu0 0.0
    %145 = vmatmul.mubr.f32.gmra.mrb[0].mxu0 %v67
    %v146 = vpop.f32.mrb[0].mxu0
    %v147 = vadd.f32 0.0, %v146
    %v148 = vpop.f32.mrb[0].mxu0
    %149 = vmatprep.mubr.f32.mxu0 0.0
    %150 = vmatmul.mubr.f32.gmra.mrb[0].mxu0 %v70
    %v151 = vpop.f32.mrb[0].mxu0
    %v152 = vadd.f32 0.0, %v151
    %v153 = vpop.f32.mrb[0].mxu0
    %154 = vmatprep.mubr.f32.mxu0 0.0
    %155 = vmatmul.mubr.f32.gmra.mrb[0].mxu0 %v73
    %v156 = vpop.f32.mrb[0].mxu0
    %v157 = vadd.f32 0.0, %v156
    %v158 = vpop.f32.mrb[0].mxu0
    %159 = vdwg.mxu0
    %v160 = vld [vmem:[#allocation2] sm:$0xff]
    %v161 = vld [vmem:[#allocation2 + $0x8] sm:$0xff]
    %v162 = vld [vmem:[#allocation2 + $0x10] sm:$0xff]
    %v163 = vld [vmem:[#allocation2 + $0x18] sm:$0xff]
    %v164 = vld [vmem:[#allocation2 + $0x20] sm:$0xff]
    %v165 = vld [vmem:[#allocation2 + $0x28] sm:$0xff]
    %v166 = vld [vmem:[#allocation2 + $0x30] sm:$0xff]
    %v167 = vld [vmem:[#allocation2 + $0x38] sm:$0xff]
    %v168 = vld [vmem:[#allocation2 + $0x40] sm:$0xff]
    %v169 = vld [vmem:[#allocation2 + $0x48] sm:$0xff]
    %v170 = vld [vmem:[#allocation2 + $0x50] sm:$0xff]
    %v171 = vld [vmem:[#allocation2 + $0x58] sm:$0xff]
    %v172 = vld [vmem:[#allocation2 + $0x60] sm:$0xff]
    %v173 = vld [vmem:[#allocation2 + $0x68] sm:$0xff]
    %v174 = vld [vmem:[#allocation2 + $0x70] sm:$0xff]
    %v175 = vld [vmem:[#allocation2 + $0x78] sm:$0xff]
    %v176 = vld [vmem:[#allocation2 + $0x80] sm:$0xff]
    %v177 = vld [vmem:[#allocation2 + $0x88] sm:$0xff]
    %v178 = vld [vmem:[#allocation2 + $0x90] sm:$0xff]
    %v179 = vld [vmem:[#allocation2 + $0x98] sm:$0xff]
    %v180 = vld [vmem:[#allocation2 + $0xa0] sm:$0xff]
    %v181 = vld [vmem:[#allocation2 + $0xa8] sm:$0xff]
    %v182 = vld [vmem:[#allocation2 + $0xb0] sm:$0xff]
    %v183 = vld [vmem:[#allocation2 + $0xb8] sm:$0xff]
    %v184 = vld [vmem:[#allocation2 + $0xc0] sm:$0xff]
    %v185 = vld [vmem:[#allocation2 + $0xc8] sm:$0xff]
    %v186 = vld [vmem:[#allocation2 + $0xd0] sm:$0xff]
    %v187 = vld [vmem:[#allocation2 + $0xd8] sm:$0xff]
    %v188 = vld [vmem:[#allocation2 + $0xe0] sm:$0xff]
    %v189 = vld [vmem:[#allocation2 + $0xe8] sm:$0xff]
    %v190 = vld [vmem:[#allocation2 + $0xf0] sm:$0xff]
    %v191 = vld [vmem:[#allocation2 + $0xf8] sm:$0xff]
    %v192 = vld [vmem:[%s4] sm:$0x1]
    %v194 = vlaneseq
    %v195 = vshrl.u32 %v194, 7
    %v196 = vsub.s32 0, %v195
    %v197 = vrot.slane %v192, %v196
    %199 = vmatprep.subr.mxu0 0.0
    %200 = vmatpush1.msra.mxu0 %v160
    %201 = vmatprep.subr.mxu0 0.0
    %202 = vmatpush1.msra.mxu0 %v161
    %203 = vmatprep.subr.mxu0 0.0
    %204 = vmatpush1.msra.mxu0 %v162
    %205 = vmatprep.subr.mxu0 0.0
    %206 = vmatpush1.msra.mxu0 %v163
    %207 = vmatprep.subr.mxu0 0.0
    %208 = vmatpush1.msra.mxu0 %v164
    %209 = vmatprep.subr.mxu0 0.0
    %210 = vmatpush1.msra.mxu0 %v165
    %211 = vmatprep.subr.mxu0 0.0
    %212 = vmatpush1.msra.mxu0 %v166
    %213 = vmatprep.subr.mxu0 0.0
    %214 = vmatpush1.msra.mxu0 %v167
    %215 = vmatprep.subr.mxu0 0.0
    %216 = vmatpush1.msra.mxu0 %v168
    %217 = vmatprep.subr.mxu0 0.0
    %218 = vmatpush1.msra.mxu0 %v169
    %219 = vmatprep.subr.mxu0 0.0
    %220 = vmatpush1.msra.mxu0 %v170
    %221 = vmatprep.subr.mxu0 0.0
    %222 = vmatpush1.msra.mxu0 %v171
    %223 = vmatprep.subr.mxu0 0.0
    %224 = vmatpush1.msra.mxu0 %v172
    %225 = vmatprep.subr.mxu0 0.0
    %226 = vmatpush1.msra.mxu0 %v173
    %227 = vmatprep.subr.mxu0 0.0
    %228 = vmatpush1.msra.mxu0 %v174
    %229 = vmatprep.subr.mxu0 0.0
    %230 = vmatpush1.msra.mxu0 %v175
    %231 = vmatprep.subr.mxu0 0.0
    %232 = vmatpush1.msra.mxu0 %v176
    %233 = vmatprep.subr.mxu0 0.0
    %234 = vmatpush1.msra.mxu0 %v177
    %235 = vmatprep.subr.mxu0 0.0
    %236 = vmatpush1.msra.mxu0 %v178
    %237 = vmatprep.subr.mxu0 0.0
    %238 = vmatpush1.msra.mxu0 %v179
    %239 = vmatprep.subr.mxu0 0.0
    %240 = vmatpush1.msra.mxu0 %v180
    %241 = vmatprep.subr.mxu0 0.0
    %242 = vmatpush1.msra.mxu0 %v181
    %243 = vmatprep.subr.mxu0 0.0
    %244 = vmatpush1.msra.mxu0 %v182
    %245 = vmatprep.subr.mxu0 0.0
    %246 = vmatpush1.msra.mxu0 %v183
    %247 = vmatprep.subr.mxu0 0.0
    %248 = vmatpush1.msra.mxu0 %v184
    %249 = vmatprep.subr.mxu0 0.0
    %250 = vmatpush1.msra.mxu0 %v185
    %251 = vmatprep.subr.mxu0 0.0
    %252 = vmatpush1.msra.mxu0 %v186
    %253 = vmatprep.subr.mxu0 0.0
    %254 = vmatpush1.msra.mxu0 %v187
    %255 = vmatprep.subr.mxu0 0.0
    %256 = vmatpush1.msra.mxu0 %v188
    %257 = vmatprep.subr.mxu0 0.0
    %258 = vmatpush1.msra.mxu0 %v189
    %259 = vmatprep.subr.mxu0 0.0
    %260 = vmatpush1.msra.mxu0 %v190
    %261 = vmatprep.subr.mxu0 0.0
    %262 = vmatpush1.msra.mxu0 %v191
    %263 = vmatprep.mubr.f32.mxu0 %v142
    %264 = vmatmul.mubr.f32.gmra.mrb[0].mxu0 %v54
    %v265 = vpop.f32.mrb[0].mxu0
    %v266 = vadd.f32 %v197, %v265
    %v267 = vpop.f32.mrb[0].mxu0
    %268 = vmatprep.mubr.f32.mxu0 %v147
    %269 = vmatmul.mubr.f32.gmra.mrb[0].mxu0 %v55
    %v270 = vpop.f32.mrb[0].mxu0
    %v271 = vadd.f32 %v197, %v270
    %v272 = vpop.f32.mrb[0].mxu0
    %273 = vmatprep.mubr.f32.mxu0 %v152
    %274 = vmatmul.mubr.f32.gmra.mrb[0].mxu0 %v56
    %v275 = vpop.f32.mrb[0].mxu0
    %v276 = vadd.f32 %v197, %v275
    %v277 = vpop.f32.mrb[0].mxu0
    %278 = vmatprep.mubr.f32.mxu0 %v157
    %279 = vmatmul.mubr.f32.gmra.mrb[0].mxu0 %v57
    %v280 = vpop.f32.mrb[0].mxu0
    %v281 = vadd.f32 %v197, %v280
    %v282 = vpop.f32.mrb[0].mxu0
    %283 = vdwg.mxu0
    %v284 = vmax.f32 %v266, 0.0
    %v285 = vmax.f32 %v271, 0.0
    %v286 = vmax.f32 %v276, 0.0
    %v287 = vmax.f32 %v281, 0.0
    %288 = vmatprep.subr.mxu0 0.0
    %289 = vmatpush1.msra.mxu0 %v284
    %290 = vmatprep.subr.mxu0 0.0
    %291 = vmatpush1.msra.mxu0 %v285
    %292 = vmatprep.subr.mxu0 0.0
    %293 = vmatpush1.msra.mxu0 %v286
    %294 = vmatprep.subr.mxu0 0.0
    %295 = vmatpush1.msra.mxu0 %v287
    %296 = vmatprep.subr.mxu0 0.0
    %297 = vmatpush1.msra.mxu0 0.0
    %298 = vmatprep.subr.mxu0 0.0
    %299 = vmatpush1.msra.mxu0 0.0
    %300 = vmatprep.subr.mxu0 0.0
    %301 = vmatpush1.msra.mxu0 0.0
    %302 = vmatprep.subr.mxu0 0.0
    %303 = vmatpush1.msra.mxu0 0.0
    %304 = vmatprep.subr.mxu0 0.0
    %305 = vmatpush1.msra.mxu0 0.0
    %306 = vmatprep.subr.mxu0 0.0
    %307 = vmatpush1.msra.mxu0 0.0
    %308 = vmatprep.subr.mxu0 0.0
    %309 = vmatpush1.msra.mxu0 0.0
    %310 = vmatprep.subr.mxu0 0.0
    %311 = vmatpush1.msra.mxu0 0.0
    %312 = vmatprep.subr.mxu0 0.0
    %313 = vmatpush1.msra.mxu0 0.0
    %314 = vmatprep.subr.mxu0 0.0
    %315 = vmatpush1.msra.mxu0 0.0
    %316 = vmatprep.subr.mxu0 0.0
    %317 = vmatpush1.msra.mxu0 0.0
    %318 = vmatprep.subr.mxu0 0.0
    %319 = vmatpush1.msra.mxu0 0.0
    %320 = vmatprep.subr.mxu0 0.0
    %321 = vmatpush1.msra.mxu0 0.0
    %322 = vmatprep.subr.mxu0 0.0
    %323 = vmatpush1.msra.mxu0 0.0
    %324 = vmatprep.subr.mxu0 0.0
    %325 = vmatpush1.msra.mxu0 0.0
    %326 = vmatprep.subr.mxu0 0.0
    %327 = vmatpush1.msra.mxu0 0.0
    %328 = vmatprep.subr.mxu0 0.0
    %329 = vmatpush1.msra.mxu0 0.0
    %330 = vmatprep.subr.mxu0 0.0
    %331 = vmatpush1.msra.mxu0 0.0
    %332 = vmatprep.subr.mxu0 0.0
    %333 = vmatpush1.msra.mxu0 0.0
    %334 = vmatprep.subr.mxu0 0.0
    %335 = vmatpush1.msra.mxu0 0.0
    %336 = vmatprep.subr.mxu0 0.0
    %337 = vmatpush1.msra.mxu0 0.0
    %338 = vmatprep.subr.mxu0 0.0
    %339 = vmatpush1.msra.mxu0 0.0
    %340 = vmatprep.subr.mxu0 0.0
    %341 = vmatpush1.msra.mxu0 0.0
    %342 = vmatprep.subr.mxu0 0.0
    %343 = vmatpush1.msra.mxu0 0.0
    %344 = vmatprep.subr.mxu0 0.0
    %345 = vmatpush1.msra.mxu0 0.0
    %346 = vmatprep.subr.mxu0 0.0
    %347 = vmatpush1.msra.mxu0 0.0
    %348 = vmatprep.subr.mxu0 0.0
    %349 = vmatpush1.msra.mxu0 0.0
    %350 = vmatprep.subr.mxu0 0.0
    %351 = vmatpush1.msra.mxu0 0.0
    %352 = vmatprep.mubr.f32.mxu0 0.0
    %353 = vmatmul.mubr.f32.gmra.mrb[0].mxu0 %v64
    %v354 = vpop.f32.mrb[0].mxu0
    %v355 = vadd.f32 0.0, %v354
    %v356 = vpop.f32.mrb[0].mxu0
    %357 = vmatprep.mubr.f32.mxu0 0.0
    %358 = vmatmul.mubr.f32.gmra.mrb[0].mxu0 %v67
    %v359 = vpop.f32.mrb[0].mxu0
    %v360 = vadd.f32 0.0, %v359
    %v361 = vpop.f32.mrb[0].mxu0
    %362 = vmatprep.mubr.f32.mxu0 0.0
    %363 = vmatmul.mubr.f32.gmra.mrb[0].mxu0 %v70
    %v364 = vpop.f32.mrb[0].mxu0
    %v365 = vadd.f32 0.0, %v364
    %v366 = vpop.f32.mrb[0].mxu0
    %367 = vmatprep.mubr.f32.mxu0 0.0
    %368 = vmatmul.mubr.f32.gmra.mrb[0].mxu0 %v73
    %v369 = vpop.f32.mrb[0].mxu0
    %v370 = vadd.f32 0.0, %v369
    %v371 = vpop.f32.mrb[0].mxu0
    %372 = vdwg.mxu0
    %v373 = vld [vmem:[#allocation4] sm:$0xff]
    %v374 = vld [vmem:[#allocation4 + $0x8] sm:$0xff]
    %v375 = vld [vmem:[#allocation4 + $0x10] sm:$0xff]
    %v376 = vld [vmem:[#allocation4 + $0x18] sm:$0xff]
    %v377 = vld [vmem:[#allocation4 + $0x20] sm:$0xff]
    %v378 = vld [vmem:[#allocation4 + $0x28] sm:$0xff]
    %v379 = vld [vmem:[#allocation4 + $0x30] sm:$0xff]
    %v380 = vld [vmem:[#allocation4 + $0x38] sm:$0xff]
    %v381 = vld [vmem:[#allocation4 + $0x40] sm:$0xff]
    %v382 = vld [vmem:[#allocation4 + $0x48] sm:$0xff]
    %v383 = vld [vmem:[#allocation4 + $0x50] sm:$0xff]
    %v384 = vld [vmem:[#allocation4 + $0x58] sm:$0xff]
    %v385 = vld [vmem:[#allocation4 + $0x60] sm:$0xff]
    %v386 = vld [vmem:[#allocation4 + $0x68] sm:$0xff]
    %v387 = vld [vmem:[#allocation4 + $0x70] sm:$0xff]
    %v388 = vld [vmem:[#allocation4 + $0x78] sm:$0xff]
    %v389 = vld [vmem:[#allocation4 + $0x80] sm:$0xff]
    %v390 = vld [vmem:[#allocation4 + $0x88] sm:$0xff]
    %v391 = vld [vmem:[#allocation4 + $0x90] sm:$0xff]
    %v392 = vld [vmem:[#allocation4 + $0x98] sm:$0xff]
    %v393 = vld [vmem:[#allocation4 + $0xa0] sm:$0xff]
    %v394 = vld [vmem:[#allocation4 + $0xa8] sm:$0xff]
    %v395 = vld [vmem:[#allocation4 + $0xb0] sm:$0xff]
    %v396 = vld [vmem:[#allocation4 + $0xb8] sm:$0xff]
    %v397 = vld [vmem:[#allocation4 + $0xc0] sm:$0xff]
    %v398 = vld [vmem:[#allocation4 + $0xc8] sm:$0xff]
    %v399 = vld [vmem:[#allocation4 + $0xd0] sm:$0xff]
    %v400 = vld [vmem:[#allocation4 + $0xd8] sm:$0xff]
    %v401 = vld [vmem:[#allocation4 + $0xe0] sm:$0xff]
    %v402 = vld [vmem:[#allocation4 + $0xe8] sm:$0xff]
    %v403 = vld [vmem:[#allocation4 + $0xf0] sm:$0xff]
    %v404 = vld [vmem:[#allocation4 + $0xf8] sm:$0xff]
    %v405 = vld [vmem:[%s6] sm:$0x1]
    %v407 = vlaneseq
    %v408 = vshrl.u32 %v407, 7
    %v409 = vsub.s32 0, %v408
    %v410 = vrot.slane %v405, %v409
    %412 = vmatprep.subr.mxu0 0.0
    %413 = vmatpush1.msra.mxu0 %v373
    %414 = vmatprep.subr.mxu0 0.0
    %415 = vmatpush1.msra.mxu0 %v374
    %416 = vmatprep.subr.mxu0 0.0
    %417 = vmatpush1.msra.mxu0 %v375
    %418 = vmatprep.subr.mxu0 0.0
    %419 = vmatpush1.msra.mxu0 %v376
    %420 = vmatprep.subr.mxu0 0.0
    %421 = vmatpush1.msra.mxu0 %v377
    %422 = vmatprep.subr.mxu0 0.0
    %423 = vmatpush1.msra.mxu0 %v378
    %424 = vmatprep.subr.mxu0 0.0
    %425 = vmatpush1.msra.mxu0 %v379
    %426 = vmatprep.subr.mxu0 0.0
    %427 = vmatpush1.msra.mxu0 %v380
    %428 = vmatprep.subr.mxu0 0.0
    %429 = vmatpush1.msra.mxu0 %v381
    %430 = vmatprep.subr.mxu0 0.0
    %431 = vmatpush1.msra.mxu0 %v382
    %432 = vmatprep.subr.mxu0 0.0
    %433 = vmatpush1.msra.mxu0 %v383
    %434 = vmatprep.subr.mxu0 0.0
    %435 = vmatpush1.msra.mxu0 %v384
    %436 = vmatprep.subr.mxu0 0.0
    %437 = vmatpush1.msra.mxu0 %v385
    %438 = vmatprep.subr.mxu0 0.0
    %439 = vmatpush1.msra.mxu0 %v386
    %440 = vmatprep.subr.mxu0 0.0
    %441 = vmatpush1.msra.mxu0 %v387
    %442 = vmatprep.subr.mxu0 0.0
    %443 = vmatpush1.msra.mxu0 %v388
    %444 = vmatprep.subr.mxu0 0.0
    %445 = vmatpush1.msra.mxu0 %v389
    %446 = vmatprep.subr.mxu0 0.0
    %447 = vmatpush1.msra.mxu0 %v390
    %448 = vmatprep.subr.mxu0 0.0
    %449 = vmatpush1.msra.mxu0 %v391
    %450 = vmatprep.subr.mxu0 0.0
    %451 = vmatpush1.msra.mxu0 %v392
    %452 = vmatprep.subr.mxu0 0.0
    %453 = vmatpush1.msra.mxu0 %v393
    %454 = vmatprep.subr.mxu0 0.0
    %455 = vmatpush1.msra.mxu0 %v394
    %456 = vmatprep.subr.mxu0 0.0
    %457 = vmatpush1.msra.mxu0 %v395
    %458 = vmatprep.subr.mxu0 0.0
    %459 = vmatpush1.msra.mxu0 %v396
    %460 = vmatprep.subr.mxu0 0.0
    %461 = vmatpush1.msra.mxu0 %v397
    %462 = vmatprep.subr.mxu0 0.0
    %463 = vmatpush1.msra.mxu0 %v398
    %464 = vmatprep.subr.mxu0 0.0
    %465 = vmatpush1.msra.mxu0 %v399
    %466 = vmatprep.subr.mxu0 0.0
    %467 = vmatpush1.msra.mxu0 %v400
    %468 = vmatprep.subr.mxu0 0.0
    %469 = vmatpush1.msra.mxu0 %v401
    %470 = vmatprep.subr.mxu0 0.0
    %471 = vmatpush1.msra.mxu0 %v402
    %472 = vmatprep.subr.mxu0 0.0
    %473 = vmatpush1.msra.mxu0 %v403
    %474 = vmatprep.subr.mxu0 0.0
    %475 = vmatpush1.msra.mxu0 %v404
    %476 = vmatprep.mubr.f32.mxu0 %v355
    %477 = vmatmul.mubr.f32.gmra.mrb[0].mxu0 %v284
    %v478 = vpop.f32.mrb[0].mxu0
    %v479 = vadd.f32 %v410, %v478
    %v480 = vpop.f32.mrb[0].mxu0
    %481 = vmatprep.mubr.f32.mxu0 %v360
    %482 = vmatmul.mubr.f32.gmra.mrb[0].mxu0 %v285
    %v483 = vpop.f32.mrb[0].mxu0
    %v484 = vadd.f32 %v410, %v483
    %v485 = vpop.f32.mrb[0].mxu0
    %486 = vmatprep.mubr.f32.mxu0 %v365
    %487 = vmatmul.mubr.f32.gmra.mrb[0].mxu0 %v286
    %v488 = vpop.f32.mrb[0].mxu0
    %v489 = vadd.f32 %v410, %v488
    %v490 = vpop.f32.mrb[0].mxu0
    %491 = vmatprep.mubr.f32.mxu0 %v370
    %492 = vmatmul.mubr.f32.gmra.mrb[0].mxu0 %v287
    %v493 = vpop.f32.mrb[0].mxu0
    %v494 = vadd.f32 %v410, %v493
    %v495 = vpop.f32.mrb[0].mxu0
    %496 = vdwg.mxu0
    %v497 = vld [vmem:[%s2] sm:$0xff]
    %v498 = vld [vmem:[%s2 + $0x8] sm:$0xff]
    %v499 = vld [vmem:[%s2 + $0x10] sm:$0xff]
    %v500 = vld [vmem:[%s2 + $0x18] sm:$0xff]
    %v501 = vld [vmem:[%s2 + $0x20] sm:$0xff]
    %v502 = vld [vmem:[%s2 + $0x28] sm:$0xff]
    %v503 = vld [vmem:[%s2 + $0x30] sm:$0xff]
    %v504 = vld [vmem:[%s2 + $0x38] sm:$0xff]
    %v505 = vld [vmem:[%s2 + $0x40] sm:$0xff]
    %v506 = vld [vmem:[%s2 + $0x48] sm:$0xff]
    %v507 = vld [vmem:[%s2 + $0x50] sm:$0xff]
    %v508 = vld [vmem:[%s2 + $0x58] sm:$0xff]
    %v509 = vld [vmem:[%s2 + $0x60] sm:$0xff]
    %v510 = vld [vmem:[%s2 + $0x68] sm:$0xff]
    %v511 = vld [vmem:[%s2 + $0x70] sm:$0xff]
    %v512 = vld [vmem:[%s2 + $0x78] sm:$0xff]
    %v514 = vsel %vm62, %v497, 0
    %v517 = vsel %vm62, %v498, 0
    %v520 = vsel %vm62, %v499, 0
    %v523 = vsel %vm62, %v500, 0
    %v526 = vsel %vm62, %v501, 0
    %v529 = vsel %vm62, %v502, 0
    %v532 = vsel %vm62, %v503, 0
    %v535 = vsel %vm62, %v504, 0
    %v538 = vsel %vm62, %v505, 0
    %v541 = vsel %vm62, %v506, 0
    %v544 = vsel %vm62, %v507, 0
    %v547 = vsel %vm62, %v508, 0
    %v550 = vsel %vm62, %v509, 0
    %v553 = vsel %vm62, %v510, 0
    %v556 = vsel %vm62, %v511, 0
    %v559 = vsel %vm62, %v512, 0
    %561 = vmatprep.subr.mxu0 0.0
    %562 = vmatpush1.msra.mxu0 %v479
    %563 = vmatprep.subr.mxu0 0.0
    %564 = vmatpush1.msra.mxu0 %v484
    %565 = vmatprep.subr.mxu0 0.0
    %566 = vmatpush1.msra.mxu0 %v489
    %567 = vmatprep.subr.mxu0 0.0
    %568 = vmatpush1.msra.mxu0 %v494
    %569 = vmatprep.subr.mxu0 0.0
    %570 = vmatpush1.msra.mxu0 0.0
    %571 = vmatprep.subr.mxu0 0.0
    %572 = vmatpush1.msra.mxu0 0.0
    %573 = vmatprep.subr.mxu0 0.0
    %574 = vmatpush1.msra.mxu0 0.0
    %575 = vmatprep.subr.mxu0 0.0
    %576 = vmatpush1.msra.mxu0 0.0
    %577 = vmatprep.subr.mxu0 0.0
    %578 = vmatpush1.msra.mxu0 0.0
    %579 = vmatprep.subr.mxu0 0.0
    %580 = vmatpush1.msra.mxu0 0.0
    %581 = vmatprep.subr.mxu0 0.0
    %582 = vmatpush1.msra.mxu0 0.0
    %583 = vmatprep.subr.mxu0 0.0
    %584 = vmatpush1.msra.mxu0 0.0
    %585 = vmatprep.subr.mxu0 0.0
    %586 = vmatpush1.msra.mxu0 0.0
    %587 = vmatprep.subr.mxu0 0.0
    %588 = vmatpush1.msra.mxu0 0.0
    %589 = vmatprep.subr.mxu0 0.0
    %590 = vmatpush1.msra.mxu0 0.0
    %591 = vmatprep.subr.mxu0 0.0
    %592 = vmatpush1.msra.mxu0 0.0
    %593 = vmatprep.subr.mxu0 0.0
    %594 = vmatpush1.msra.mxu0 0.0
    %595 = vmatprep.subr.mxu0 0.0
    %596 = vmatpush1.msra.mxu0 0.0
    %597 = vmatprep.subr.mxu0 0.0
    %598 = vmatpush1.msra.mxu0 0.0
    %599 = vmatprep.subr.mxu0 0.0
    %600 = vmatpush1.msra.mxu0 0.0
    %601 = vmatprep.subr.mxu0 0.0
    %602 = vmatpush1.msra.mxu0 0.0
    %603 = vmatprep.subr.mxu0 0.0
    %604 = vmatpush1.msra.mxu0 0.0
    %605 = vmatprep.subr.mxu0 0.0
    %606 = vmatpush1.msra.mxu0 0.0
    %607 = vmatprep.subr.mxu0 0.0
    %608 = vmatpush1.msra.mxu0 0.0
    %609 = vmatprep.subr.mxu0 0.0
    %610 = vmatpush1.msra.mxu0 0.0
    %611 = vmatprep.subr.mxu0 0.0
    %612 = vmatpush1.msra.mxu0 0.0
    %613 = vmatprep.subr.mxu0 0.0
    %614 = vmatpush1.msra.mxu0 0.0
    %615 = vmatprep.subr.mxu0 0.0
    %616 = vmatpush1.msra.mxu0 0.0
    %617 = vmatprep.subr.mxu0 0.0
    %618 = vmatpush1.msra.mxu0 0.0
    %619 = vmatprep.subr.mxu0 0.0
    %620 = vmatpush1.msra.mxu0 0.0
    %621 = vmatprep.subr.mxu0 0.0
    %622 = vmatpush1.msra.mxu0 0.0
    %623 = vmatprep.subr.mxu0 0.0
    %624 = vmatpush1.msra.mxu0 0.0
    %625 = vmatprep.mubr.f32.mxu0 0.0
    %626 = vmatmul.mubr.f32.gmra.mrb[0].mxu0 %v514
    %v627 = vpop.f32.mrb[0].mxu0
    %v628 = vadd.f32 0.0, %v627
    %v629 = vpop.f32.mrb[0].mxu0
    %630 = vmatprep.mubr.f32.mxu0 0.0
    %631 = vmatmul.mubr.f32.gmra.mrb[0].mxu0 %v517
    %v632 = vpop.f32.mrb[0].mxu0
    %v633 = vadd.f32 0.0, %v632
    %v634 = vpop.f32.mrb[0].mxu0
    %635 = vmatprep.mubr.f32.mxu0 0.0
    %636 = vmatmul.mubr.f32.gmra.mrb[0].mxu0 %v520
    %v637 = vpop.f32.mrb[0].mxu0
    %v638 = vadd.f32 0.0, %v637
    %v639 = vpop.f32.mrb[0].mxu0
    %640 = vmatprep.mubr.f32.mxu0 0.0
    %641 = vmatmul.mubr.f32.gmra.mrb[0].mxu0 %v523
    %v642 = vpop.f32.mrb[0].mxu0
    %v643 = vadd.f32 0.0, %v642
    %v644 = vpop.f32.mrb[0].mxu0
    %645 = vmatprep.mubr.f32.mxu0 0.0
    %646 = vmatmul.mubr.f32.gmra.mrb[0].mxu0 %v526
    %v647 = vpop.f32.mrb[0].mxu0
    %v648 = vadd.f32 0.0, %v647
    %v649 = vpop.f32.mrb[0].mxu0
    %650 = vmatprep.mubr.f32.mxu0 0.0
    %651 = vmatmul.mubr.f32.gmra.mrb[0].mxu0 %v529
    %v652 = vpop.f32.mrb[0].mxu0
    %v653 = vadd.f32 0.0, %v652
    %v654 = vpop.f32.mrb[0].mxu0
    %655 = vmatprep.mubr.f32.mxu0 0.0
    %656 = vmatmul.mubr.f32.gmra.mrb[0].mxu0 %v532
    %v657 = vpop.f32.mrb[0].mxu0
    %v658 = vadd.f32 0.0, %v657
    %v659 = vpop.f32.mrb[0].mxu0
    %660 = vmatprep.mubr.f32.mxu0 0.0
    %661 = vmatmul.mubr.f32.gmra.mrb[0].mxu0 %v535
    %v662 = vpop.f32.mrb[0].mxu0
    %v663 = vadd.f32 0.0, %v662
    %v664 = vpop.f32.mrb[0].mxu0
    %665 = vmatprep.mubr.f32.mxu0 0.0
    %666 = vmatmul.mubr.f32.gmra.mrb[0].mxu0 %v538
    %v667 = vpop.f32.mrb[0].mxu0
    %v668 = vadd.f32 0.0, %v667
    %v669 = vpop.f32.mrb[0].mxu0
    %670 = vmatprep.mubr.f32.mxu0 0.0
    %671 = vmatmul.mubr.f32.gmra.mrb[0].mxu0 %v541
    %v672 = vpop.f32.mrb[0].mxu0
    %v673 = vadd.f32 0.0, %v672
    %v674 = vpop.f32.mrb[0].mxu0
    %675 = vmatprep.mubr.f32.mxu0 0.0
    %676 = vmatmul.mubr.f32.gmra.mrb[0].mxu0 %v544
    %v677 = vpop.f32.mrb[0].mxu0
    %v678 = vadd.f32 0.0, %v677
    %v679 = vpop.f32.mrb[0].mxu0
    %680 = vmatprep.mubr.f32.mxu0 0.0
    %681 = vmatmul.mubr.f32.gmra.mrb[0].mxu0 %v547
    %v682 = vpop.f32.mrb[0].mxu0
    %v683 = vadd.f32 0.0, %v682
    %v684 = vpop.f32.mrb[0].mxu0
    %685 = vmatprep.mubr.f32.mxu0 0.0
    %686 = vmatmul.mubr.f32.gmra.mrb[0].mxu0 %v550
    %v687 = vpop.f32.mrb[0].mxu0
    %v688 = vadd.f32 0.0, %v687
    %v689 = vpop.f32.mrb[0].mxu0
    %690 = vmatprep.mubr.f32.mxu0 0.0
    %691 = vmatmul.mubr.f32.gmra.mrb[0].mxu0 %v553
    %v692 = vpop.f32.mrb[0].mxu0
    %v693 = vadd.f32 0.0, %v692
    %v694 = vpop.f32.mrb[0].mxu0
    %695 = vmatprep.mubr.f32.mxu0 0.0
    %696 = vmatmul.mubr.f32.gmra.mrb[0].mxu0 %v556
    %v697 = vpop.f32.mrb[0].mxu0
    %v698 = vadd.f32 0.0, %v697
    %v699 = vpop.f32.mrb[0].mxu0
    %700 = vmatprep.mubr.f32.mxu0 0.0
    %701 = vmatmul.mubr.f32.gmra.mrb[0].mxu0 %v559
    %v702 = vpop.f32.mrb[0].mxu0
    %v703 = vadd.f32 0.0, %v702
    %v704 = vpop.f32.mrb[0].mxu0
    %705 = vdwg.mxu0
    %v706 = vmul.f32 %v628, %v668
    %v707 = vmul.f32 %v633, %v673
    %v708 = vmul.f32 %v638, %v678
    %v709 = vmul.f32 %v643, %v683
    %v710 = vmul.f32 %v648, %v688
    %v711 = vmul.f32 %v653, %v693
    %v712 = vmul.f32 %v658, %v698
    %v713 = vmul.f32 %v663, %v703
    %714 = vadd.xlane.f32.xlu0 %v706
    %v715 = vpop.xlane.xlu0 %714
    %716 = vadd.xlane.f32.xlu0 %v707
    %v717 = vpop.xlane.xlu0 %716
    %718 = vadd.xlane.f32.xlu0 %v708
    %v719 = vpop.xlane.xlu0 %718
    %720 = vadd.xlane.f32.xlu0 %v709
    %v721 = vpop.xlane.xlu0 %720
    %722 = vadd.xlane.f32.xlu0 %v710
    %v723 = vpop.xlane.xlu0 %722
    %724 = vadd.xlane.f32.xlu0 %v711
    %v725 = vpop.xlane.xlu0 %724
    %726 = vadd.xlane.f32.xlu0 %v712
    %v727 = vpop.xlane.xlu0 %726
    %728 = vadd.xlane.f32.xlu0 %v713
    %v729 = vpop.xlane.xlu0 %728
    %vm730 = vcmask 7168
    %731 = vst.msk [vmem:[%s7] sm:$0xff] %vm730, %v715
    %732 = vst.msk [vmem:[%s7 + $0x8] sm:$0xff] %vm730, %v717
    %733 = vst.msk [vmem:[%s7 + $0x10] sm:$0xff] %vm730, %v719
    %734 = vst.msk [vmem:[%s7 + $0x18] sm:$0xff] %vm730, %v721
    %735 = vst.msk [vmem:[%s7 + $0x20] sm:$0xff] %vm730, %v723
    %736 = vst.msk [vmem:[%s7 + $0x28] sm:$0xff] %vm730, %v725
    %737 = vst.msk [vmem:[%s7 + $0x30] sm:$0xff] %vm730, %v727
    %738 = vst.msk [vmem:[%s7 + $0x38] sm:$0xff] %vm730, %v729
    // Predicated region
    $region38: #{tpu_custom_call.1} parent=1 // pred_check
      _
    $region39: #{tpu_custom_call.1} parent=1 // pred_check_branch
      %740 = sbr.rel (0) target = $region41
    $region40: #{tpu_custom_call.1} parent=1 // pred_region
      _
    $region41: #{tpu_custom_call.1} parent=1 // pred_fallthru
      _
    // Predicated region
    $region42: #{tpu_custom_call.1} parent=1 // pred_check
      _
    $region43: #{tpu_custom_call.1} parent=1 // pred_check_branch
      %742 = sbr.rel (0) target = $region45
    $region44: #{tpu_custom_call.1} parent=1 // pred_region
      _
    $region45: #{tpu_custom_call.1} parent=1 // pred_fallthru
      _
    %743 = vsyncpa [#allocation3], 1
    %744 = vsyncpa [#allocation5], 1

</llo_original>
